<compile_context>
chip_gen: v7x
topology: tpu7x:2x2x1
jax: 0.10.0
libtpu: 0.0.40
codegen_flags: <defaults>
</compile_context>

<pallas_src>
import math
from functools import partial

import jax
import jax.numpy as jnp
import numpy as np
from jax.experimental import pallas as pl
from jax.experimental.pallas import tpu as pltpu

_VMEM_LIMIT = 48 * 1024 * 1024      # < 64 MiB (v7x VMEM), > 32 MiB default scoped limit
_MAX_ROW_TILE = 512
_COMPUTE_DTYPE = jnp.bfloat16


def _round_up(x, m):
    return ((x + m - 1) // m) * m


def _layernorm(x, g, b, eps=1e-5):
    mu = jnp.mean(x, axis=-1, keepdims=True)
    xc = x - mu
    var = jnp.mean(xc * xc, axis=-1, keepdims=True)
    return xc * jax.lax.rsqrt(var + eps) * g + b


# ---------------------- generic row-tiled Pallas launcher --------------------

def _rowwise_call(kernel, row_inputs, const_inputs, out_trailing, *,
                  max_tile=_MAX_ROW_TILE, flops=None, transcendentals=0):
    """Launch `kernel` over a 1-D grid of row tiles.

    row_inputs:   arrays with leading dim R, tiled over rows (block = (tr, *rest)).
    const_inputs: arrays passed whole every step (weights stay VMEM-resident).
    out_trailing: list of trailing shapes; outputs are (R, *trailing) float32.
    """
    R = row_inputs[0].shape[0]
    tr = min(_round_up(R, 8), max_tile)
    Rp = _round_up(R, tr)
    if Rp != R:
        row_inputs = [jnp.pad(a, ((0, Rp - R),) + ((0, 0),) * (a.ndim - 1))
                      for a in row_inputs]
    grid = (Rp // tr,)

    def _row_spec(a):
        nd = a.ndim
        return pl.BlockSpec((tr,) + tuple(a.shape[1:]),
                            lambda i, _n=nd: (i,) + (0,) * (_n - 1))

    def _const_spec(a):
        nd = a.ndim
        return pl.BlockSpec(tuple(a.shape), lambda i, _n=nd: (0,) * _n)

    in_specs = ([_row_spec(a) for a in row_inputs]
                + [_const_spec(c) for c in const_inputs])
    out_shape = [jax.ShapeDtypeStruct((Rp,) + tuple(t), jnp.float32)
                 for t in out_trailing]
    out_specs = [pl.BlockSpec((tr,) + tuple(t), lambda i, _n=len(t): (i,) + (0,) * _n)
                 for t in out_trailing]

    cost = None
    if flops is not None:
        nbytes = sum(int(a.size) * a.dtype.itemsize
                     for a in list(row_inputs) + list(const_inputs))
        nbytes += sum(int(np.prod((Rp,) + tuple(t))) * 4 for t in out_trailing)
        cost = pl.CostEstimate(flops=int(flops), transcendentals=int(transcendentals),
                               bytes_accessed=int(nbytes))

    outs = pl.pallas_call(
        kernel,
        grid=grid,
        out_shape=out_shape if len(out_shape) > 1 else out_shape[0],
        in_specs=in_specs,
        out_specs=out_specs if len(out_specs) > 1 else out_specs[0],
        compiler_params=pltpu.CompilerParams(
            dimension_semantics=("parallel",),
            vmem_limit_bytes=_VMEM_LIMIT),
        cost_estimate=cost,
    )(*row_inputs, *const_inputs)

    if len(out_trailing) == 1:
        outs = (outs,)
    outs = tuple(o[:R] if Rp != R else o for o in outs)
    return outs if len(outs) > 1 else outs[0]


# ------------------------------ Pallas kernels -------------------------------

def _linear_kernel(x_ref, w_ref, b_ref, o_ref, *, relu=False):
    y = jnp.dot(x_ref[...].astype(w_ref.dtype), w_ref[...],
                preferred_element_type=jnp.float32) + b_ref[...]
    if relu:
        y = jnp.maximum(y, 0.0)
    o_ref[...] = y


def pallas_linear(x, w, b, *, relu=False):
    """y = x @ w + b over the last dim, row-tiled with VMEM-resident weights."""
    lead = x.shape[:-1]
    k = x.shape[-1]
    n = w.shape[-1]
    x2 = x.reshape(-1, k).astype(jnp.float32)
    out = _rowwise_call(partial(_linear_kernel, relu=relu),
                        [x2], [w, b.reshape(1, n).astype(jnp.float32)], [(n,)],
                        flops=2 * x2.shape[0] * k * n)
    return out.reshape(lead + (n,))


def _ffn_ln_kernel(x_ref, w1_ref, b1_ref, w2_ref, b2_ref, g_ref, be_ref, o_ref):
    x = x_ref[...]
    cdt = w1_ref.dtype
    h = jnp.dot(x.astype(cdt), w1_ref[...],
                preferred_element_type=jnp.float32) + b1_ref[...]
    h = jnp.maximum(h, 0.0)                       # hidden activation stays on-chip
    y = jnp.dot(h.astype(cdt), w2_ref[...],
                preferred_element_type=jnp.float32) + b2_ref[...]
    o_ref[...] = _layernorm(x + y, g_ref[...], be_ref[...])


def ffn_ln(x, w1, b1, w2, b2, g, be):
    """LayerNorm(x + W2 @ relu(W1 @ x + b1) + b2), fully fused."""
    lead = x.shape[:-1]
    d = x.shape[-1]
    dff = w1.shape[-1]
    x2 = x.reshape(-1, d).astype(jnp.float32)
    out = _rowwise_call(
        _ffn_ln_kernel, [x2],
        [w1, b1.reshape(1, -1).astype(jnp.float32),
         w2, b2.reshape(1, -1).astype(jnp.float32),
         g.reshape(1, -1).astype(jnp.float32), be.reshape(1, -1).astype(jnp.float32)],
        [(d,)], flops=4 * x2.shape[0] * d * dff)
    return out.reshape(lead + (d,))


def _msda_qproj_kernel(q_ref, ow_ref, ob_ref, atw_ref, atb_ref, so_ref, aw_ref, *,
                       nheads, lp):
    q = q_ref[...]
    cdt = ow_ref.dtype
    qc = q.astype(cdt)
    so_ref[...] = jnp.dot(qc, ow_ref[...],
                          preferred_element_type=jnp.float32) + ob_ref[...]
    logits = jnp.dot(qc, atw_ref[...],
                     preferred_element_type=jnp.float32) + atb_ref[...]
    for h in range(nheads):                       # per-head (L*P)-group softmax
        lh = logits[:, h * lp:(h + 1) * lp]
        lh = lh - jnp.max(lh, axis=-1, keepdims=True)
        e = jnp.exp(lh)
        aw_ref[:, h * lp:(h + 1) * lp] = e * pl.reciprocal(
            jnp.sum(e, axis=-1, keepdims=True), approx=True)


def msda_query_proj(q2, ow, ob, atw, atb, nheads, lp):
    n_off = ow.shape[-1]
    n_att = atw.shape[-1]
    return _rowwise_call(
        partial(_msda_qproj_kernel, nheads=nheads, lp=lp),
        [q2],
        [ow, ob.reshape(1, -1).astype(jnp.float32),
         atw, atb.reshape(1, -1).astype(jnp.float32)],
        [(n_off,), (n_att,)],
        flops=2 * q2.shape[0] * q2.shape[1] * (n_off + n_att),
        transcendentals=q2.shape[0] * n_att)


def _msda_out_ln_kernel(samp_ref, awx_ref, res_ref, wo_ref, bo_ref, g_ref, be_ref, o_ref):
    weighted = jnp.sum(samp_ref[...] * awx_ref[...], axis=1)     # (tr, M*D)
    proj = jnp.dot(weighted.astype(wo_ref.dtype), wo_ref[...],
                   preferred_element_type=jnp.float32) + bo_ref[...]
    o_ref[...] = _layernorm(res_ref[...] + proj, g_ref[...], be_ref[...])


def msda_epilogue_ln(samp, awx, res, wo, bo, g, be):
    d = wo.shape[-1]
    lp = samp.shape[1]
    return _rowwise_call(
        _msda_out_ln_kernel, [samp, awx, res],
        [wo, bo.reshape(1, -1).astype(jnp.float32),
         g.reshape(1, -1).astype(jnp.float32), be.reshape(1, -1).astype(jnp.float32)],
        [(d,)],
        flops=samp.shape[0] * (2 * lp * d + 2 * d * d))


def _mha_ln_kernel(x_ref, bias_ref, wi_ref, bi_ref, wo_ref, bo_ref, g_ref, be_ref,
                   o_ref, *, nheads):
    x = x_ref[...]                                  # (R, E) f32, rows grouped by query
    R, E = x.shape
    dh = E // nheads
    scale = 1.0 / math.sqrt(dh)
    cdt = wi_ref.dtype
    qkv = jnp.dot(x.astype(cdt), wi_ref[...],
                  preferred_element_type=jnp.float32) + bi_ref[...]   # fused QKV matmul
    bias = bias_ref[...]                            # block-diagonal additive mask (R, R)
    wo_f = wo_ref[...].astype(jnp.float32)
    acc = None
    for h in range(nheads):                         # heads unrolled, dh columns each
        q = (qkv[:, h * dh:(h + 1) * dh] * scale).astype(cdt)
        k = qkv[:, E + h * dh:E + (h + 1) * dh].astype(cdt)
        v = qkv[:, 2 * E + h * dh:2 * E + (h + 1) * dh].astype(cdt)
        s = jax.lax.dot_general(q, k, (((1,), (1,)), ((), ())),
                                preferred_element_type=jnp.float32) + bias
        s = s - jnp.max(s, axis=-1, keepdims=True)
        p = jnp.exp(s)
        p = (p * pl.reciprocal(jnp.sum(p, axis=-1, keepdims=True),
                               approx=True)).astype(cdt)
        o_h = jnp.dot(p, v, preferred_element_type=jnp.float32)       # (R, dh)
        w_h = wo_f[h * dh:(h + 1) * dh, :].astype(cdt)
        part = jnp.dot(o_h.astype(cdt), w_h, preferred_element_type=jnp.float32)
        acc = part if acc is None else acc + part
    proj = acc + bo_ref[...]
    o_ref[...] = _layernorm(x + proj, g_ref[...], be_ref[...])


def mha_self_attn_ln(x2, attn_bias, mp, g, be, nheads):
    """Fused nn.MultiheadAttention (q=k=v=x) + residual + LayerNorm, lane-dense output.

    Rows of x2 are (query, batch)-major; attn_bias carries the block-diagonal mask so
    attention only mixes rows sharing the same query index (== PyTorch batch element).
    """
    # TODO(synk): single-block kernel; for very large num_queries*bs this block-diagonal
    # self-attention should be tiled per query group instead of masking a dense RxR score.
    R, E = x2.shape
    dh = E // nheads
    flops = 2 * R * E * 3 * E + nheads * (4 * R * R * dh) + 2 * R * E * E
    cost = pl.CostEstimate(
        flops=int(flops), transcendentals=int(nheads * R * R),
        bytes_accessed=int(4 * (x2.size + attn_bias.size + R * E)
                           + 2 * (mp['in_w'].size + mp['out_w'].size)))
    return pl.pallas_call(
        partial(_mha_ln_kernel, nheads=nheads),
        out_shape=jax.ShapeDtypeStruct((R, E), jnp.float32),
        in_specs=[pl.BlockSpec(memory_space=pltpu.MemorySpace.VMEM)] * 8,
        out_specs=pl.BlockSpec(memory_space=pltpu.MemorySpace.VMEM),
        compiler_params=pltpu.CompilerParams(vmem_limit_bytes=_VMEM_LIMIT),
        cost_estimate=cost,
    )(x2.astype(jnp.float32), attn_bias.astype(jnp.float32),
      mp['in_w'], mp['in_b'].reshape(1, -1).astype(jnp.float32),
      mp['out_w'], mp['out_b'].reshape(1, -1).astype(jnp.float32),
      g.reshape(1, -1).astype(jnp.float32), be.reshape(1, -1).astype(jnp.float32))


# --------------------------------- JAX glue ----------------------------------

def position_embedding_sine(bs, h, w, num_pos_feats, temperature=10000.0,
                            scale=2.0 * math.pi, eps=1e-6):
    ones = jnp.ones((bs, h, w), jnp.float32)
    y_embed = jnp.cumsum(ones, axis=1)
    x_embed = jnp.cumsum(ones, axis=2)
    y_embed = y_embed / (y_embed[:, -1:, :] + eps) * scale
    x_embed = x_embed / (x_embed[:, :, -1:] + eps) * scale
    dim_t = jnp.arange(num_pos_feats, dtype=jnp.float32)
    dim_t = temperature ** (2.0 * jnp.floor(dim_t / 2.0) / num_pos_feats)
    pos_x = x_embed[:, :, :, None] / dim_t
    pos_y = y_embed[:, :, :, None] / dim_t
    pos_x = jnp.stack((jnp.sin(pos_x[:, :, :, 0::2]),
                       jnp.cos(pos_x[:, :, :, 1::2])), axis=4).reshape(bs, h, w, -1)
    pos_y = jnp.stack((jnp.sin(pos_y[:, :, :, 0::2]),
                       jnp.cos(pos_y[:, :, :, 1::2])), axis=4).reshape(bs, h, w, -1)
    pos = jnp.concatenate((pos_y, pos_x), axis=3)
    return jnp.transpose(pos, (0, 3, 1, 2))              # (bs, 2*num_pos_feats, h, w)


def encoder_reference_points(spatial_shapes):
    refs = []
    for H, W in spatial_shapes:
        ry, rx = jnp.meshgrid(jnp.linspace(0.5, H - 0.5, H, dtype=jnp.float32),
                              jnp.linspace(0.5, W - 0.5, W, dtype=jnp.float32),
                              indexing='ij')
        ry = ry.reshape(-1)[None] / H
        rx = rx.reshape(-1)[None] / W
        refs.append(jnp.stack((rx, ry), -1))
    ref = jnp.concatenate(refs, axis=1)                   # (1, S, 2)
    return jnp.tile(ref[:, :, None], (1, 1, len(spatial_shapes), 1))


def decoder_reference_points(spatial_shapes, h, w):
    ry, rx = jnp.meshgrid(jnp.linspace(0.5, h - 0.5, h, dtype=jnp.float32),
                          jnp.linspace(0.5, w - 0.5, w, dtype=jnp.float32),
                          indexing='ij')
    ry = ry.reshape(-1)[None] / h
    rx = rx.reshape(-1)[None] / w
    ref = jnp.stack((rx, ry), -1)                         # (1, h*w, 2)
    return jnp.tile(ref[:, :, None], (1, 1, len(spatial_shapes), 1))


def grid_sample_bilinear_zeros(value, grid):
    """F.grid_sample(mode='bilinear', padding_mode='zeros', align_corners=False)."""
    B, C, H, W = value.shape
    x = (grid[..., 0] + 1.0) * (W / 2.0) - 0.5
    y = (grid[..., 1] + 1.0) * (H / 2.0) - 0.5
    x0 = jnp.floor(x)
    y0 = jnp.floor(y)
    x1 = x0 + 1.0
    y1 = y0 + 1.0
    wx1 = x - x0
    wx0 = 1.0 - wx1
    wy1 = y - y0
    wy0 = 1.0 - wy1
    vflat = value.reshape(B, C, H * W)

    # TODO(synk): data-dependent bilinear gather stays in plain JAX (XLA gather).
    def gather(xi, yi):
        valid = (xi >= 0) & (xi <= W - 1) & (yi >= 0) & (yi <= H - 1)
        xc = jnp.clip(xi, 0, W - 1).astype(jnp.int32)
        yc = jnp.clip(yi, 0, H - 1).astype(jnp.int32)
        idx = (yc * W + xc).reshape(B, 1, -1)
        g = jnp.take_along_axis(vflat, idx, axis=2).reshape(B, C, *xi.shape[1:])
        return g * valid[:, None, ...].astype(value.dtype)

    v00 = gather(x0, y0)
    v01 = gather(x1, y0)
    v10 = gather(x0, y1)
    v11 = gather(x1, y1)
    return (v00 * (wx0 * wy0)[:, None] + v01 * (wx1 * wy0)[:, None]
            + v10 * (wx0 * wy1)[:, None] + v11 * (wx1 * wy1)[:, None])


def ms_deform_attn(p, query, residual, input_flatten, reference_points, spatial_shapes,
                   n_heads, n_points, norm_g, norm_b):
    """Fused MSDeformAttn + residual + LayerNorm.  Returns LN(residual + MSDA(query))."""
    N, Lq, d = query.shape
    S = input_flatten.shape[1]
    L = len(spatial_shapes)
    M, P = n_heads, n_points
    D = d // M
    LP = L * P

    # value projection (row-tiled Pallas linear)
    value = pallas_linear(input_flatten, p['value_w'], p['value_b']).reshape(N, S, M, D)

    # fused sampling-offset + attention-weight projections (+ per-head softmax)
    q2 = query.reshape(N * Lq, d).astype(jnp.float32)
    so, aw = msda_query_proj(q2, p['off_w'], p['off_b'], p['att_w'], p['att_b'], M, LP)
    so = so.reshape(N, Lq, M, L, P, 2)

    shapes_arr = jnp.asarray(spatial_shapes, dtype=jnp.float32)        # (L, 2) = (H, W)
    offset_normalizer = jnp.stack([shapes_arr[:, 1], shapes_arr[:, 0]], -1)
    sampling_locations = (reference_points[:, :, None, :, None, :]
                          + so / offset_normalizer[None, None, None, :, None, :])

    # TODO(synk): gather + rearrangement stays in XLA; it presents a lane-dense
    # (rows, L*P, M*D) slab to the fused Pallas epilogue below.
    splits = np.cumsum([h * w for h, w in spatial_shapes])[:-1]
    value_list = jnp.split(value, splits, axis=1)
    grids = 2.0 * sampling_locations - 1.0
    sampled = []
    for lid, (H, W) in enumerate(spatial_shapes):
        v = value_list[lid].reshape(N, H * W, M * D).transpose(0, 2, 1)
        v = v.reshape(N * M, D, H, W)
        g = grids[:, :, :, lid].transpose(0, 2, 1, 3, 4).reshape(N * M, Lq, P, 2)
        s_l = grid_sample_bilinear_zeros(v, g)                        # (N*M, D, Lq, P)
        s_l = s_l.reshape(N, M, D, Lq, P).transpose(0, 3, 4, 1, 2)    # (N, Lq, P, M, D)
        sampled.append(s_l.reshape(N, Lq, P, M * D))
    samp = jnp.stack(sampled, axis=2).reshape(N * Lq, LP, M * D)

    # expand attention weights to channel-major layout (matches samp channel order)
    awx = jnp.repeat(aw.reshape(N * Lq, M, LP).transpose(0, 2, 1), D, axis=-1)

    out = msda_epilogue_ln(samp, awx,
                           residual.reshape(N * Lq, d).astype(jnp.float32),
                           p['out_w'], p['out_b'], norm_g, norm_b)
    return out.reshape(N, Lq, d)


# ------------------------------ layers / forward -----------------------------

def encoder_layer_forward(p, src, pos, enc_ref, spatial_shapes, nhead, n_points):
    src = ms_deform_attn(p['msda'], src + pos, src, src, enc_ref, spatial_shapes,
                         nhead, n_points, p['norm1_g'], p['norm1_b'])
    src = ffn_ln(src, p['lin1_w'], p['lin1_b'], p['lin2_w'], p['lin2_b'],
                 p['norm2_g'], p['norm2_b'])
    return src


def decoder_layer_forward(p, tgt, memory, dec_ref, attn_bias, spatial_shapes,
                          nhead, n_points):
    # tgt: (Lq, bs, d); query_pos is None in context_branch.
    # Original PyTorch transposes so nn.MultiheadAttention sees (seq=bs, batch=Lq, E);
    # the block-diagonal mask in attn_bias reproduces that grouping exactly.
    Lq, bs, d = tgt.shape
    x2 = tgt.reshape(Lq * bs, d)
    tgt = mha_self_attn_ln(x2, attn_bias, p['mha'], p['norm2_g'], p['norm2_b'],
                           nhead).reshape(Lq, bs, d)

    tgt_b = jnp.transpose(tgt, (1, 0, 2))                 # (bs, Lq, d)
    tgt_b = ms_deform_attn(p['msda'], tgt_b, tgt_b, memory, dec_ref, spatial_shapes,
                           nhead, n_points, p['norm1_g'], p['norm1_b'])
    tgt_b = ffn_ln(tgt_b, p['lin1_w'], p['lin1_b'], p['lin2_w'], p['lin2_b'],
                   p['norm3_g'], p['norm3_b'])
    return jnp.transpose(tgt_b, (1, 0, 2))                # (Lq, bs, d)


def prepare_static(level_embed, feat_shapes, bs, q_H, q_W, num_queries, d_model):
    """Shape-only precomputation (pos embeddings, reference points, self-attn mask)."""
    spatial_shapes = [(h, w) for (h, w) in feat_shapes]
    lvl_pos = []
    for lvl, (h, w) in enumerate(spatial_shapes):
        pe = position_embedding_sine(bs, h, w, num_pos_feats=d_model // 2)
        pe = pe.reshape(bs, d_model, h * w).transpose(0, 2, 1)
        lvl_pos.append(pe + level_embed[lvl][None, None, :])
    lvl_pos = jnp.concatenate(lvl_pos, axis=1)
    enc_ref = encoder_reference_points(spatial_shapes)
    dec_ref = decoder_reference_points(spatial_shapes, q_H, q_W)
    gid = jnp.repeat(jnp.arange(num_queries, dtype=jnp.int32), bs)
    attn_bias = jnp.where(gid[:, None] == gid[None, :], 0.0, -1e30).astype(jnp.float32)
    return dict(spatial_shapes=spatial_shapes, lvl_pos=lvl_pos,
                enc_ref=enc_ref, dec_ref=dec_ref, attn_bias=attn_bias)


def context_branch_forward(params, ms_feats, context, query_embed, q_H, q_W, cfg,
                           static=None):
    d = cfg['d_model']
    nhead = cfg['nhead']
    bs = ms_feats[0].shape[0]
    num_queries = query_embed.shape[0]
    if static is None:
        static = prepare_static(params['level_embed'],
                                [(f.shape[2], f.shape[3]) for f in ms_feats],
                                bs, q_H, q_W, num_queries, d)
    spatial_shapes = static['spatial_shapes']

    # flatten NCHW features to (bs, HW, C) and concat over levels
    src_flatten = jnp.concatenate(
        [f.reshape(bs, d, f.shape[2] * f.shape[3]).transpose(0, 2, 1) for f in ms_feats],
        axis=1)
    # level_start_index is implicit: ms_deform_attn splits by spatial_shapes.

    memory = src_flatten
    for lp_ in params['encoder']:
        memory = encoder_layer_forward(lp_, memory, static['lvl_pos'], static['enc_ref'],
                                       spatial_shapes, nhead, cfg['enc_n_points'])

    qe = jnp.tile(query_embed[:, None, :], (1, bs, 1))    # (Lq, bs, d)
    out = context + qe
    for lp_ in params['decoder']:
        out = decoder_layer_forward(lp_, out, memory, static['dec_ref'],
                                    static['attn_bias'], spatial_shapes,
                                    nhead, cfg['dec_n_points'])
    return out                                            # (Lq, bs, d)


# --------------------------------- Param init ---------------------------------

def init_params(key, cfg):
    d, dff = cfg['d_model'], cfg['dim_feedforward']
    L, M = cfg['num_feature_levels'], cfg['nhead']
    ks = iter(jax.random.split(key, 256))

    def dense(i, o, scale=0.05):
        w = (jax.random.normal(next(ks), (i, o), jnp.float32) * scale).astype(_COMPUTE_DTYPE)
        b = jax.random.normal(next(ks), (o,), jnp.float32) * 0.01
        return w, b

    def msda(P):
        vw, vb = dense(d, d)
        ow, ob = dense(d, M * L * P * 2, scale=0.02)
        aw, ab = dense(d, M * L * P, scale=0.02)
        pw, pb = dense(d, d)
        return dict(value_w=vw, value_b=vb, off_w=ow, off_b=ob,
                    att_w=aw, att_b=ab, out_w=pw, out_b=pb)

    def ln():
        return jnp.ones((d,), jnp.float32), jnp.zeros((d,), jnp.float32)

    enc_layers = []
    for _ in range(cfg['num_encoder_layers']):
        n1g, n1b = ln()
        n2g, n2b = ln()
        l1w, l1b = dense(d, dff)
        l2w, l2b = dense(dff, d)
        enc_layers.append(dict(msda=msda(cfg['enc_n_points']),
                               norm1_g=n1g, norm1_b=n1b, norm2_g=n2g, norm2_b=n2b,
                               lin1_w=l1w, lin1_b=l1b, lin2_w=l2w, lin2_b=l2b))

    dec_layers = []
    for _ in range(cfg['num_decoder_layers']):
        inw, inb = dense(d, 3 * d)
        ow, ob = dense(d, d)
        n1g, n1b = ln()
        n2g, n2b = ln()
        n3g, n3b = ln()
        l1w, l1b = dense(d, dff)
        l2w, l2b = dense(dff, d)
        dec_layers.append(dict(msda=msda(cfg['dec_n_points']),
                               mha=dict(in_w=inw, in_b=inb, out_w=ow, out_b=ob),
                               norm1_g=n1g, norm1_b=n1b, norm2_g=n2g, norm2_b=n2b,
                               norm3_g=n3g, norm3_b=n3b,
                               lin1_w=l1w, lin1_b=l1b, lin2_w=l2w, lin2_b=l2b))

    level_embed = jax.random.normal(next(ks), (L, d), jnp.float32)
    return dict(level_embed=level_embed, encoder=enc_layers, decoder=dec_layers)


# ------------------------------------ main -------------------------------------

if __name__ == "__main__":
    cfg = dict(d_model=32, nhead=4, num_encoder_layers=2, num_decoder_layers=2,
               dim_feedforward=64, dropout=0.0, activation='relu',
               num_feature_levels=2, dec_n_points=2, enc_n_points=2)

    key = jax.random.PRNGKey(0)
    kp, k1, k2, kc, kq = jax.random.split(key, 5)
    params = init_params(kp, cfg)

    bs = 2
    ms_feats = [jax.random.normal(k1, (bs, cfg['d_model'], 8, 8), jnp.float32),
                jax.random.normal(k2, (bs, cfg['d_model'], 4, 4), jnp.float32)]
    q_H, q_W = 4, 4
    num_queries = q_H * q_W
    context = jax.random.normal(kc, (num_queries, bs, cfg['d_model']), jnp.float32)
    query_embed = jax.random.normal(kq, (num_queries, cfg['d_model']), jnp.float32)

    static = prepare_static(params['level_embed'],
                            [(f.shape[2], f.shape[3]) for f in ms_feats],
                            bs, q_H, q_W, num_queries, cfg['d_model'])

    out = context_branch_forward(params, ms_feats, context, query_embed, q_H, q_W, cfg,
                                 static=static)
    out = jax.block_until_ready(out)
    assert out.shape == (num_queries, bs, cfg['d_model'])
    assert bool(jnp.all(jnp.isfinite(out)))
    print("KERNEL_OK")
</pallas_src>

<mosaic_0001>
module attributes {stable_mosaic.version = 11 : i64} {
  func.func @_linear_kernel(%arg0: i32, %arg1: memref<160x32xf32, #tpu.memory_space<vmem>>, %arg2: memref<32x32xbf16, #tpu.memory_space<vmem>>, %arg3: memref<1x32xf32, #tpu.memory_space<vmem>>, %arg4: memref<160x32xf32, #tpu.memory_space<vmem>>) attributes {dimension_semantics = [#tpu.dimension_semantics<parallel>], iteration_bounds = array<i64: 1>, scalar_prefetch = 0 : i64, scratch_operands = 0 : i64, tpu.core_type = #tpu.core_type<tc>, window_params = [{transform_indices = @transform_0, window_bounds = array<i64: 160, 32>}, {pipeline_mode = #tpu.pipeline_mode<synchronous>, transform_indices = @transform_1, window_bounds = array<i64: 32, 32>}, {pipeline_mode = #tpu.pipeline_mode<synchronous>, transform_indices = @transform_2, window_bounds = array<i64: 1, 32>}, {transform_indices = @transform_3, window_bounds = array<i64: 160, 32>}]} {
    %c0 = arith.constant 0 : index
    %c0_0 = arith.constant 0 : index
    %0 = vector.load %arg1[%c0, %c0_0] : memref<160x32xf32, #tpu.memory_space<vmem>>, vector<160x32xf32>
    %1 = arith.truncf %0 : vector<160x32xf32> to vector<160x32xbf16>
    %c0_1 = arith.constant 0 : index
    %c0_2 = arith.constant 0 : index
    %2 = vector.load %arg2[%c0_1, %c0_2] : memref<32x32xbf16, #tpu.memory_space<vmem>>, vector<32x32xbf16>
    %cst = arith.constant dense<0.000000e+00> : vector<160x32xf32>
    %3 = tpu.matmul %1, %2, %cst {dimension_numbers = #tpu.dot_dimension_numbers<[1], [0], [0], [1], [0, 0, 1, 1], [], []>} : vector<160x32xbf16>, vector<32x32xbf16>, vector<160x32xf32> -> vector<160x32xf32>
    %c0_3 = arith.constant 0 : index
    %c0_4 = arith.constant 0 : index
    %4 = vector.load %arg3[%c0_3, %c0_4] : memref<1x32xf32, #tpu.memory_space<vmem>>, vector<1x32xf32>
    %5 = vector.broadcast %4 : vector<1x32xf32> to vector<160x32xf32>
    %6 = arith.addf %3, %5 : vector<160x32xf32>
    %c0_5 = arith.constant 0 : index
    %c0_6 = arith.constant 0 : index
    %7 = vector.load %arg4[%c0_5, %c0_6] : memref<160x32xf32, #tpu.memory_space<vmem>>, vector<160x32xf32>
    tpu.vector_store %arg4[%c0_5, %c0_6], %6 {strides = array<i32>} : memref<160x32xf32, #tpu.memory_space<vmem>>, vector<160x32xf32>,
    return
  }
  func.func @transform_0(%arg0: i32) -> (i32, i32) {
    %c0_i32 = arith.constant 0 : i32
    %c0_i32_0 = arith.constant 0 : i32
    return %arg0, %c0_i32 : i32, i32
  }
  func.func @transform_1(%arg0: i32) -> (i32, i32) {
    %c0_i32 = arith.constant 0 : i32
    %c0_i32_0 = arith.constant 0 : i32
    %c0_i32_1 = arith.constant 0 : i32
    return %c0_i32, %c0_i32_0 : i32, i32
  }
  func.func @transform_2(%arg0: i32) -> (i32, i32) {
    %c0_i32 = arith.constant 0 : i32
    %c0_i32_0 = arith.constant 0 : i32
    %c0_i32_1 = arith.constant 0 : i32
    return %c0_i32, %c0_i32_0 : i32, i32
  }
  func.func @transform_3(%arg0: i32) -> (i32, i32) {
    %c0_i32 = arith.constant 0 : i32
    %c0_i32_0 = arith.constant 0 : i32
    return %arg0, %c0_i32 : i32, i32
  }
}

</mosaic_0001>

<llo_original>
// kernel: tpu_custom_call.1
$region0: #{tpu_custom_call.1}
  #allocation0 [shape = 'u32[]', space=smem, size = 0x4, offset = 0x4, fixed_abs, tag = 'smem constant byte address 0x4 - core index']
  #allocation1 [shape = 'u32[144,128]{1,0:T(1,128)}', space=vmem, size = 0x12000, scoped, tag = 'internal scratch']
  %s0 = inlined_call_operand.vmem [shape: f32[160,32], index: 0, kind: input, shape index: {}]
  %s1 = inlined_call_operand.vmem [shape: bf16[32,32], index: 1, kind: input, shape index: {}]
  %s2 = inlined_call_operand.vmem [shape: f32[1,32], index: 2, kind: input, shape index: {}]
  %s3 = inlined_call_operand.vmem [shape: f32[160,32], index: 3, kind: output, shape index: {}]
  %s4 = sld [smem:[#allocation0]]
  $region22: #{tpu_custom_call.1} parent=0
    _
  %s6 = ssub.s32 1, %s4
  %s7 = scalar_select 0, %s6, %s4
  // Predicated region
  $region2: #{tpu_custom_call.1} parent=0 // pred_check
    _
  $region3: #{tpu_custom_call.1} parent=0 // pred_check_branch
    %9 = sbr.rel (0) target = $region5
  $region4: #{tpu_custom_call.1} parent=0 // pred_region
    _
  $region5: #{tpu_custom_call.1} parent=0 // pred_fallthru
    _
  // Predicated region
  $region6: #{tpu_custom_call.1} parent=0 // pred_check
    _
  $region7: #{tpu_custom_call.1} parent=0 // pred_check_branch
    %11 = sbr.rel (0) target = $region9
  $region8: #{tpu_custom_call.1} parent=0 // pred_region
    _
  $region9: #{tpu_custom_call.1} parent=0 // pred_fallthru
    _
  // Predicated region
  $region10: #{tpu_custom_call.1} parent=0 // pred_check
    _
  $region11: #{tpu_custom_call.1} parent=0 // pred_check_branch
    %13 = sbr.rel (0) target = $region13
  $region12: #{tpu_custom_call.1} parent=0 // pred_region
    _
  $region13: #{tpu_custom_call.1} parent=0 // pred_fallthru
    _
  %v15 = vld [vmem:[%s0] sm:$0xff]
  %v16 = vld [vmem:[%s0 + $0x8] sm:$0xff]
  %v17 = vld [vmem:[%s0 + $0x10] sm:$0xff]
  %v18 = vld [vmem:[%s0 + $0x18] sm:$0xff]
  %v19 = vld [vmem:[%s0 + $0x20] sm:$0xff]
  %v20 = vld [vmem:[%s0 + $0x28] sm:$0xff]
  %v21 = vld [vmem:[%s0 + $0x30] sm:$0xff]
  %v22 = vld [vmem:[%s0 + $0x38] sm:$0xff]
  %v23 = vld [vmem:[%s0 + $0x40] sm:$0xff]
  %v24 = vld [vmem:[%s0 + $0x48] sm:$0xff]
  %v25 = vld [vmem:[%s0 + $0x50] sm:$0xff]
  %v26 = vld [vmem:[%s0 + $0x58] sm:$0xff]
  %v27 = vld [vmem:[%s0 + $0x60] sm:$0xff]
  %v28 = vld [vmem:[%s0 + $0x68] sm:$0xff]
  %v29 = vld [vmem:[%s0 + $0x70] sm:$0xff]
  %v30 = vld [vmem:[%s0 + $0x78] sm:$0xff]
  %v31 = vld [vmem:[%s0 + $0x80] sm:$0xff]
  %v32 = vld [vmem:[%s0 + $0x88] sm:$0xff]
  %v33 = vld [vmem:[%s0 + $0x90] sm:$0xff]
  %v34 = vld [vmem:[%s0 + $0x98] sm:$0xff]
  %v35 = vpack.c.bf16 %v16, %v15
  %v36 = vpack.c.bf16 %v18, %v17
  %v37 = vpack.c.bf16 %v20, %v19
  %v38 = vpack.c.bf16 %v22, %v21
  %v39 = vpack.c.bf16 %v24, %v23
  %v40 = vpack.c.bf16 %v26, %v25
  %v41 = vpack.c.bf16 %v28, %v27
  %v42 = vpack.c.bf16 %v30, %v29
  %v43 = vpack.c.bf16 %v32, %v31
  %v44 = vpack.c.bf16 %v34, %v33
  %v45 = vld [vmem:[%s1] sm:$0xf]
  %v46 = vld [vmem:[%s1 + $0x4] sm:$0xf]
  %v47 = vld [vmem:[%s1 + $0x8] sm:$0xf]
  %v48 = vld [vmem:[%s1 + $0xc] sm:$0xf]
  %v49 = vld [vmem:[%s2] sm:$0x1]
  %v51 = vlaneseq
  %v52 = vshrl.u32 %v51, 7
  %v53 = vsub.s32 0, %v52
  %v54 = vrot.slane %v49, %v53
  %v60 = vunpack.c.l.b16 %v45
  %v61 = vunpack.c.l.b16 %v46
  %v62 = vunpack.c.l.b16 %v47
  %v63 = vunpack.c.l.b16 %v48
  %v64 = vpack.c.b16 %v61, %v60
  %v65 = vpack.c.b16 %v63, %v62
  %vm68 = vcmask 261120
  %v70 = vsel %vm68, %v35, 0
  %v73 = vsel %vm68, %v36, 0
  %v76 = vsel %vm68, %v37, 0
  %v79 = vsel %vm68, %v38, 0
  %v82 = vsel %vm68, %v39, 0
  %v85 = vsel %vm68, %v40, 0
  %v88 = vsel %vm68, %v41, 0
  %v91 = vsel %vm68, %v42, 0
  %v94 = vsel %vm68, %v43, 0
  %v97 = vsel %vm68, %v44, 0
  %99 = vmatprep.subr.bf16.mxu0 0
  %100 = vmatpush1.bf16.msra.mxu0 %v64
  %101 = vmatprep.subr.bf16.mxu0 0
  %102 = vmatpush1.bf16.msra.mxu0 %v65
  %103 = vmatprep.subr.bf16.mxu0 0
  %104 = vmatpush1.bf16.msra.mxu0 0
  %105 = vmatprep.subr.bf16.mxu0 0
  %106 = vmatpush1.bf16.msra.mxu0 0
  %107 = vmatprep.subr.bf16.mxu0 0
  %108 = vmatpush1.bf16.msra.mxu0 0
  %109 = vmatprep.subr.bf16.mxu0 0
  %110 = vmatpush1.bf16.msra.mxu0 0
  %111 = vmatprep.subr.bf16.mxu0 0
  %112 = vmatpush1.bf16.msra.mxu0 0
  %113 = vmatprep.subr.bf16.mxu0 0
  %114 = vmatpush1.bf16.msra.mxu0 0
  %115 = vmatprep.subr.bf16.mxu0 0
  %116 = vmatpush1.bf16.msra.mxu0 0
  %117 = vmatprep.subr.bf16.mxu0 0
  %118 = vmatpush1.bf16.msra.mxu0 0
  %119 = vmatprep.subr.bf16.mxu0 0
  %120 = vmatpush1.bf16.msra.mxu0 0
  %121 = vmatprep.subr.bf16.mxu0 0
  %122 = vmatpush1.bf16.msra.mxu0 0
  %123 = vmatprep.subr.bf16.mxu0 0
  %124 = vmatpush1.bf16.msra.mxu0 0
  %125 = vmatprep.subr.bf16.mxu0 0
  %126 = vmatpush1.bf16.msra.mxu0 0
  %127 = vmatprep.subr.bf16.mxu0 0
  %128 = vmatpush1.bf16.msra.mxu0 0
  %129 = vmatprep.subr.bf16.mxu0 0
  %130 = vmatpush1.bf16.msra.mxu0 0
  %131 = vmatprep.mubr.bf16.mxu0 0
  %132 = vmatmul.mubr.bf16.gmra.mrb[0].mxu0 %v70
  %v133 = vpop.f32.mrb[0].mxu0
  %v134 = vadd.f32 %v54, %v133
  %v135 = vpop.f32.mrb[0].mxu0
  %v136 = vpop.f32.mrb[0].mxu0
  %v137 = vadd.f32 %v54, %v136
  %v138 = vpop.f32.mrb[0].mxu0
  %139 = vmatprep.mubr.bf16.mxu0 0
  %140 = vmatmul.mubr.bf16.gmra.mrb[0].mxu0 %v73
  %v141 = vpop.f32.mrb[0].mxu0
  %v142 = vadd.f32 %v54, %v141
  %v143 = vpop.f32.mrb[0].mxu0
  %v144 = vpop.f32.mrb[0].mxu0
  %v145 = vadd.f32 %v54, %v144
  %v146 = vpop.f32.mrb[0].mxu0
  %147 = vmatprep.mubr.bf16.mxu0 0
  %148 = vmatmul.mubr.bf16.gmra.mrb[0].mxu0 %v76
  %v149 = vpop.f32.mrb[0].mxu0
  %v150 = vadd.f32 %v54, %v149
  %v151 = vpop.f32.mrb[0].mxu0
  %v152 = vpop.f32.mrb[0].mxu0
  %v153 = vadd.f32 %v54, %v152
  %v154 = vpop.f32.mrb[0].mxu0
  %155 = vmatprep.mubr.bf16.mxu0 0
  %156 = vmatmul.mubr.bf16.gmra.mrb[0].mxu0 %v79
  %v157 = vpop.f32.mrb[0].mxu0
  %v158 = vadd.f32 %v54, %v157
  %v159 = vpop.f32.mrb[0].mxu0
  %v160 = vpop.f32.mrb[0].mxu0
  %v161 = vadd.f32 %v54, %v160
  %v162 = vpop.f32.mrb[0].mxu0
  %163 = vmatprep.mubr.bf16.mxu0 0
  %164 = vmatmul.mubr.bf16.gmra.mrb[0].mxu0 %v82
  %v165 = vpop.f32.mrb[0].mxu0
  %v166 = vadd.f32 %v54, %v165
  %v167 = vpop.f32.mrb[0].mxu0
  %v168 = vpop.f32.mrb[0].mxu0
  %v169 = vadd.f32 %v54, %v168
  %v170 = vpop.f32.mrb[0].mxu0
  %171 = vmatprep.mubr.bf16.mxu0 0
  %172 = vmatmul.mubr.bf16.gmra.mrb[0].mxu0 %v85
  %v173 = vpop.f32.mrb[0].mxu0
  %v174 = vadd.f32 %v54, %v173
  %v175 = vpop.f32.mrb[0].mxu0
  %v176 = vpop.f32.mrb[0].mxu0
  %v177 = vadd.f32 %v54, %v176
  %v178 = vpop.f32.mrb[0].mxu0
  %179 = vmatprep.mubr.bf16.mxu0 0
  %180 = vmatmul.mubr.bf16.gmra.mrb[0].mxu0 %v88
  %v181 = vpop.f32.mrb[0].mxu0
  %v182 = vadd.f32 %v54, %v181
  %v183 = vpop.f32.mrb[0].mxu0
  %v184 = vpop.f32.mrb[0].mxu0
  %v185 = vadd.f32 %v54, %v184
  %v186 = vpop.f32.mrb[0].mxu0
  %187 = vmatprep.mubr.bf16.mxu0 0
  %188 = vmatmul.mubr.bf16.gmra.mrb[0].mxu0 %v91
  %v189 = vpop.f32.mrb[0].mxu0
  %v190 = vadd.f32 %v54, %v189
  %v191 = vpop.f32.mrb[0].mxu0
  %v192 = vpop.f32.mrb[0].mxu0
  %v193 = vadd.f32 %v54, %v192
  %v194 = vpop.f32.mrb[0].mxu0
  %195 = vmatprep.mubr.bf16.mxu0 0
  %196 = vmatmul.mubr.bf16.gmra.mrb[0].mxu0 %v94
  %v197 = vpop.f32.mrb[0].mxu0
  %v198 = vadd.f32 %v54, %v197
  %v199 = vpop.f32.mrb[0].mxu0
  %v200 = vpop.f32.mrb[0].mxu0
  %v201 = vadd.f32 %v54, %v200
  %v202 = vpop.f32.mrb[0].mxu0
  %203 = vmatprep.mubr.bf16.mxu0 0
  %204 = vmatmul.mubr.bf16.gmra.mrb[0].mxu0 %v97
  %v205 = vpop.f32.mrb[0].mxu0
  %v206 = vadd.f32 %v54, %v205
  %v207 = vpop.f32.mrb[0].mxu0
  %v208 = vpop.f32.mrb[0].mxu0
  %v209 = vadd.f32 %v54, %v208
  %v210 = vpop.f32.mrb[0].mxu0
  %211 = vdwg.mxu0
  %212 = vst.msk [vmem:[%s3] sm:$0xff] %vm68, %v134
  %213 = vst.msk [vmem:[%s3 + $0x8] sm:$0xff] %vm68, %v137
  %214 = vst.msk [vmem:[%s3 + $0x10] sm:$0xff] %vm68, %v142
  %215 = vst.msk [vmem:[%s3 + $0x18] sm:$0xff] %vm68, %v145
  %216 = vst.msk [vmem:[%s3 + $0x20] sm:$0xff] %vm68, %v150
  %217 = vst.msk [vmem:[%s3 + $0x28] sm:$0xff] %vm68, %v153
  %218 = vst.msk [vmem:[%s3 + $0x30] sm:$0xff] %vm68, %v158
  %219 = vst.msk [vmem:[%s3 + $0x38] sm:$0xff] %vm68, %v161
  %220 = vst.msk [vmem:[%s3 + $0x40] sm:$0xff] %vm68, %v166
  %221 = vst.msk [vmem:[%s3 + $0x48] sm:$0xff] %vm68, %v169
  %222 = vst.msk [vmem:[%s3 + $0x50] sm:$0xff] %vm68, %v174
  %223 = vst.msk [vmem:[%s3 + $0x58] sm:$0xff] %vm68, %v177
  %224 = vst.msk [vmem:[%s3 + $0x60] sm:$0xff] %vm68, %v182
  %225 = vst.msk [vmem:[%s3 + $0x68] sm:$0xff] %vm68, %v185
  %226 = vst.msk [vmem:[%s3 + $0x70] sm:$0xff] %vm68, %v190
  %227 = vst.msk [vmem:[%s3 + $0x78] sm:$0xff] %vm68, %v193
  %228 = vst.msk [vmem:[%s3 + $0x80] sm:$0xff] %vm68, %v198
  %229 = vst.msk [vmem:[%s3 + $0x88] sm:$0xff] %vm68, %v201
  %230 = vst.msk [vmem:[%s3 + $0x90] sm:$0xff] %vm68, %v206
  %231 = vst.msk [vmem:[%s3 + $0x98] sm:$0xff] %vm68, %v209
  // Predicated region
  $region14: #{tpu_custom_call.1} parent=0 // pred_check
    _
  $region15: #{tpu_custom_call.1} parent=0 // pred_check_branch
    %233 = sbr.rel (0) target = $region17
  $region16: #{tpu_custom_call.1} parent=0 // pred_region
    _
  $region17: #{tpu_custom_call.1} parent=0 // pred_fallthru
    _
  // Predicated region
  $region18: #{tpu_custom_call.1} parent=0 // pred_check
    _
  $region19: #{tpu_custom_call.1} parent=0 // pred_check_branch
    %235 = sbr.rel (0) target = $region21
  $region20: #{tpu_custom_call.1} parent=0 // pred_region
    _
  $region21: #{tpu_custom_call.1} parent=0 // pred_fallthru
    _

</llo_original>
